<compile_context>
chip_gen: v7x
topology: tpu7x:2x2x1
jax: 0.10.0
libtpu: 0.0.40
codegen_flags: <defaults>
</compile_context>

<pallas_src>
import jax
import jax.numpy as jnp
from jax.experimental import pallas as pl
from jax.experimental.pallas import tpu as pltpu


def _round_up(a: int, b: int) -> int:
    return (a + b - 1) // b * b


def _avgpool_kernel(pwt2_ref, x_ref, o_ref):
    """One grid step: tn feature maps.

    pwt2_ref : (2W, ncols)   W-side pooling taps (value 1/4).  Columns
               [0:Wo] pool the even input rows, columns [ncols-Wo:ncols]
               pool the odd input rows (the offset is lane-tile aligned).
    x_ref    : (tn*Hh, 2W)   folded input: row j of map m holds
               [x_m[2j, :] | x_m[2j+1, :]] along the lane dim (native dtype).
    o_ref    : (tn, Hh+1, Wo)
    """
    tn, ho, wo = o_ref.shape
    hh = ho - 1
    ncols = pwt2_ref.shape[1]
    off = ncols - wo

    # ---- W-side pooling: one large 2-D MXU matmul over all tn*Hh rows ------
    # Native-dtype operands (bf16 feeds the MXU natively), f32 accumulation.
    # Both 0.5 factors of the 2x2 average are folded into the 1/4 taps.
    t = jnp.dot(x_ref[...], pwt2_ref[...],
                preferred_element_type=jnp.float32)           # (tn*Hh, ncols)
    t = t.reshape(tn, hh, ncols)                              # Hh % 8 == 0 -> layout-free

    a = t[:, :, :wo]             # pooled even rows  x[2j]
    b = t[:, :, off:off + wo]    # pooled odd rows   x[2j+1]  (aligned slice)

    # ---- H-side pooling: pairwise sublane adds on the VPU ------------------
    #   out[0]  = a[0]              (top pad tap absent)
    #   out[i]  = b[i-1] + a[i]     for 1 <= i <= Hh-1
    #   out[Hh] = b[Hh-1]           (bottom pad tap absent)
    o_ref[:, 0:1, :] = a[:, 0:1, :].astype(o_ref.dtype)
    if hh > 1:
        o_ref[:, 1:hh, :] = (a[:, 1:, :] + b[:, :hh - 1, :]).astype(o_ref.dtype)
    o_ref[:, hh:ho, :] = b[:, hh - 1:hh, :].astype(o_ref.dtype)


def _vmem_capacity_bytes() -> int:
    """Per-TensorCore VMEM capacity; falls back to the smallest (v7x)."""
    try:
        cap = int(pltpu.get_tpu_info().vmem_capacity_bytes)
        if cap > 0:
            return cap
    except Exception:
        pass
    return 64 * 1024 * 1024


def downsample(x: jnp.ndarray, *, max_maps_per_block: int = 2048) -> jnp.ndarray:
    """AvgPool2d(kernel_size=2, stride=2, padding=1) on NCHW input."""
    B, C, H, W = x.shape
    Ho = H // 2 + 1          # true output rows/cols
    Wo = W // 2 + 1
    N = B * C
    dtype = x.dtype
    isz = jnp.dtype(dtype).itemsize
    MiB = 1024 * 1024

    # Fold consecutive row pairs along the lane dim.  Hh (row pairs per map)
    # is rounded up to the f32 sublane tile so the in-kernel reshape is
    # layout-free; the zero rows only create output rows that are sliced off.
    Hh = _round_up((H + 1) // 2, 8)
    H_pad = 2 * Hh
    Ho_k = Hh + 1
    if H_pad != H:
        x = jnp.pad(x, ((0, 0), (0, 0), (0, H_pad - H), (0, 0)))
    x2 = x.reshape(N * Hh, 2 * W)      # free re-view of contiguous NCHW data

    # W-side pooling taps: P[w, o] = 1/4 iff w in {2o-1, 2o} (pad taps absent,
    # fixed 1/4 divisor == count_include_pad=True).  Block-diagonal layout with
    # the odd-row block at a lane-tile aligned offset.
    wvec = jnp.arange(W)[:, None]
    ovec = jnp.arange(Wo)[None, :]
    taps = ((wvec == 2 * ovec - 1) | (wvec == 2 * ovec)).astype(jnp.float32)
    wo_off = _round_up(Wo, 128)
    ncols = wo_off + Wo
    pwt2 = jnp.zeros((2 * W, ncols), jnp.float32)
    pwt2 = pwt2.at[:W, :Wo].set(taps)
    pwt2 = pwt2.at[W:, wo_off:].set(taps)
    pwt2 = (0.25 * pwt2).astype(dtype)        # 0.25 exact in bf16/f32

    # ---- VMEM budgeting with padded tile sizes (lanes->128, sublane tile) ---
    vmem_cap = _vmem_capacity_bytes()                       # 64 MiB/TC v7x, 128 MiB v5e/v6e
    vmem_limit = max(32 * MiB, min(vmem_cap * 7 // 8, 104 * MiB))
    sub = max(8, 32 // isz)                                 # 8 f32, 16 bf16
    lane = 128
    bytes_in = Hh * _round_up(2 * W, lane) * isz            # per map (Hh % 8 == 0)
    bytes_out = _round_up(Ho_k, sub) * _round_up(Wo, lane) * isz
    bytes_t = Hh * _round_up(ncols, lane) * 4               # f32 matmul result
    bytes_hp = 3 * Hh * _round_up(Wo, lane) * 4             # a / b / sum temporaries
    per_map = (3 * bytes_in          # 2x double-buffered input block + loaded value
               + 2 * bytes_out       # double-buffered output block
               + bytes_t + bytes_hp)
    fixed = 2 * _round_up(2 * W, sub) * _round_up(ncols, lane) * isz + 2 * MiB
    budget = vmem_limit * 3 // 4 - fixed

    tn = max(1, budget // per_map)
    tn = min(tn, N, max_maps_per_block)
    if N > 1:                         # >=2 grid steps -> both v7x TCs get work
        tn = min(tn, (N + 1) // 2)
    grid_n = pl.cdiv(N, tn)
    tn = pl.cdiv(N, grid_n)           # re-balance block size for the same step count
    grid_n = pl.cdiv(N, tn)

    out_flat = pl.pallas_call(
        _avgpool_kernel,
        out_shape=jax.ShapeDtypeStruct((N, Ho_k, Wo), dtype),
        grid_spec=pltpu.PrefetchScalarGridSpec(
            num_scalar_prefetch=0,
            grid=(grid_n,),
            in_specs=[
                pl.BlockSpec((2 * W, ncols), lambda n: (0, 0)),
                pl.BlockSpec((tn * Hh, 2 * W), lambda n: (n, 0)),
            ],
            out_specs=pl.BlockSpec((tn, Ho_k, Wo), lambda n: (n, 0, 0)),
        ),
        compiler_params=pltpu.CompilerParams(
            dimension_semantics=("parallel",),
            vmem_limit_bytes=int(vmem_limit),
        ),
    )(pwt2, x2)

    out = out_flat.reshape(B, C, Ho_k, Wo)
    if Ho_k != Ho:
        out = out[:, :, :Ho, :]
    return out


def downsample_reference(x: jnp.ndarray) -> jnp.ndarray:
    """Plain-JAX reference matching torch.nn.AvgPool2d(2, 2, padding=1).

    (Valid for even H, W — sufficient for the test below; the Pallas kernel
    itself also handles odd sizes via wrapper-side padding.)
    """
    B, C, H, W = x.shape
    xp = jnp.pad(x, ((0, 0), (0, 0), (1, 1), (1, 1)))
    Ho, Wo = (H + 2) // 2, (W + 2) // 2
    return xp.reshape(B, C, Ho, 2, Wo, 2).mean(axis=(3, 5))


if __name__ == "__main__":
    key = jax.random.PRNGKey(0)
    B, C, H, W = 2, 4, 16, 16
    x = jax.random.normal(key, (B, C, H, W), dtype=jnp.float32)

    out = downsample(x)
    out = jax.block_until_ready(out)

    ref = downsample_reference(x)
    assert out.shape == (B, C, H // 2 + 1, W // 2 + 1), out.shape
    assert jnp.allclose(out, ref, atol=1e-5, rtol=1e-5), "mismatch vs reference"

    print("KERNEL_OK")
</pallas_src>

<mosaic_0001>
module attributes {stable_mosaic.version = 11 : i64} {
  func.func @_avgpool_kernel(%arg0: i32, %arg1: memref<32x137xf32, #tpu.memory_space<vmem>>, %arg2: memref<32x32xf32, #tpu.memory_space<vmem>>, %arg3: memref<4x9x9xf32, #tpu.memory_space<vmem>>) attributes {dimension_semantics = [#tpu.dimension_semantics<parallel>], iteration_bounds = array<i64: 2>, scalar_prefetch = 0 : i64, scratch_operands = 0 : i64, tpu.core_type = #tpu.core_type<tc>, window_params = [{pipeline_mode = #tpu.pipeline_mode<synchronous>, transform_indices = @transform_0, window_bounds = array<i64: 32, 137>}, {transform_indices = @transform_1, window_bounds = array<i64: 32, 32>}, {transform_indices = @transform_2, window_bounds = array<i64: 4, 9, 9>}]} {
    %c0 = arith.constant 0 : index
    %c0_0 = arith.constant 0 : index
    %0 = vector.load %arg2[%c0, %c0_0] : memref<32x32xf32, #tpu.memory_space<vmem>>, vector<32x32xf32>
    %c0_1 = arith.constant 0 : index
    %c0_2 = arith.constant 0 : index
    %1 = vector.load %arg1[%c0_1, %c0_2] : memref<32x137xf32, #tpu.memory_space<vmem>>, vector<32x137xf32>
    %cst = arith.constant dense<0.000000e+00> : vector<32x137xf32>
    %2 = tpu.matmul %0, %1, %cst {dimension_numbers = #tpu.dot_dimension_numbers<[1], [0], [0], [1], [0, 0, 1, 1], [], []>} : vector<32x32xf32>, vector<32x137xf32>, vector<32x137xf32> -> vector<32x137xf32>
    %3 = vector.shape_cast %2 : vector<32x137xf32> to vector<4x8x137xf32>
    %4 = vector.extract_strided_slice %3 {offsets = [0, 0, 0], sizes = [4, 8, 9], strides = [1, 1, 1]} : vector<4x8x137xf32> to vector<4x8x9xf32>
    %5 = vector.extract_strided_slice %3 {offsets = [0, 0, 128], sizes = [4, 8, 9], strides = [1, 1, 1]} : vector<4x8x137xf32> to vector<4x8x9xf32>
    %6 = vector.extract_strided_slice %4 {offsets = [0, 0, 0], sizes = [4, 1, 9], strides = [1, 1, 1]} : vector<4x8x9xf32> to vector<4x1x9xf32>
    %c0_3 = arith.constant 0 : index
    %c0_4 = arith.constant 0 : index
    %c0_5 = arith.constant 0 : index
    %7 = vector.load %arg3[%c0_3, %c0_4, %c0_5] : memref<4x9x9xf32, #tpu.memory_space<vmem>>, vector<4x1x9xf32>
    tpu.vector_store %arg3[%c0_3, %c0_4, %c0_5], %6 {strides = array<i32>} : memref<4x9x9xf32, #tpu.memory_space<vmem>>, vector<4x1x9xf32>,
    %8 = vector.extract_strided_slice %4 {offsets = [0, 1, 0], sizes = [4, 7, 9], strides = [1, 1, 1]} : vector<4x8x9xf32> to vector<4x7x9xf32>
    %9 = vector.extract_strided_slice %5 {offsets = [0, 0, 0], sizes = [4, 7, 9], strides = [1, 1, 1]} : vector<4x8x9xf32> to vector<4x7x9xf32>
    %10 = arith.addf %8, %9 : vector<4x7x9xf32>
    %c0_6 = arith.constant 0 : index
    %c1 = arith.constant 1 : index
    %c0_7 = arith.constant 0 : index
    %11 = vector.load %arg3[%c0_6, %c1, %c0_7] : memref<4x9x9xf32, #tpu.memory_space<vmem>>, vector<4x7x9xf32>
    tpu.vector_store %arg3[%c0_6, %c1, %c0_7], %10 {strides = array<i32>} : memref<4x9x9xf32, #tpu.memory_space<vmem>>, vector<4x7x9xf32>,
    %12 = vector.extract_strided_slice %5 {offsets = [0, 7, 0], sizes = [4, 1, 9], strides = [1, 1, 1]} : vector<4x8x9xf32> to vector<4x1x9xf32>
    %c0_8 = arith.constant 0 : index
    %c8 = arith.constant 8 : index
    %c0_9 = arith.constant 0 : index
    %13 = vector.load %arg3[%c0_8, %c8, %c0_9] : memref<4x9x9xf32, #tpu.memory_space<vmem>>, vector<4x1x9xf32>
    tpu.vector_store %arg3[%c0_8, %c8, %c0_9], %12 {strides = array<i32>} : memref<4x9x9xf32, #tpu.memory_space<vmem>>, vector<4x1x9xf32>,
    return
  }
  func.func @transform_0(%arg0: i32) -> (i32, i32) {
    %c0_i32 = arith.constant 0 : i32
    %c0_i32_0 = arith.constant 0 : i32
    %c0_i32_1 = arith.constant 0 : i32
    return %c0_i32, %c0_i32_0 : i32, i32
  }
  func.func @transform_1(%arg0: i32) -> (i32, i32) {
    %c0_i32 = arith.constant 0 : i32
    %c0_i32_0 = arith.constant 0 : i32
    return %arg0, %c0_i32 : i32, i32
  }
  func.func @transform_2(%arg0: i32) -> (i32, i32, i32) {
    %c0_i32 = arith.constant 0 : i32
    %c0_i32_0 = arith.constant 0 : i32
    %c0_i32_1 = arith.constant 0 : i32
    return %arg0, %c0_i32, %c0_i32_0 : i32, i32, i32
  }
}

</mosaic_0001>

<llo_original>
// kernel: tpu_custom_call.1
$region0: #{tpu_custom_call.1}
  #allocation0 [shape = 'u32[]', space=smem, size = 0x4, offset = 0x4, fixed_abs, tag = 'smem constant byte address 0x4 - core index']
  #allocation1 [shape = 'u32[144,128]{1,0:T(1,128)}', space=vmem, size = 0x12000, scoped, tag = 'internal scratch']
  %s0 = inlined_call_operand.vmem [shape: f32[32,137], index: 0, kind: input, shape index: {}]
  %s1 = inlined_call_operand.vmem [shape: f32[64,32], index: 1, kind: input, shape index: {}]
  %s2 = inlined_call_operand.vmem [shape: f32[8,9,9], index: 2, kind: output, shape index: {}]
  %s3 = sld [smem:[#allocation0]]
  $region41: #{tpu_custom_call.1} parent=0
    _
  %s5 = ssub.s32 1, %s3
  %s6 = scalar_select 0, %s5, %s3
  loop: start=0, step=1, limit=4
  $region2: #{tpu_custom_call.1} parent=0 // loop_pre_header
    _
  $region3: #{tpu_custom_call.1} parent=0 // loop_header
    %s8 = sphi 0, %s12
    %p9 = scmp.ge.s32.totalorder %s8, 4
    %s16 = sphi 0, %s16
    %s18 = sphi 0, %s16
    %s19 = sphi 0, %s18
    %s33 = sphi 0, %s19
    %s39 = sphi 0, %s41
    %s42 = sphi 0, %s39
    %s43 = sphi 0, %s42
    %s59 = sphi 0, %s43
    %s65 = sphi 0, %s67
    %s68 = sphi 0, %s65
    %s69 = sphi 0, %s68
    %s85 = sphi 0, %s69
  $region4: #{tpu_custom_call.1} parent=0 // loop_header_branch
    %11 = sbr.rel (%p9) target = $region8
  $region5: #{tpu_custom_call.1} parent=0 // loop_body
    %s13 = ssub.s32 %s8, 1
    %s14 = ssub.s32 %s8, 2
    %s15 = sadd.s32 %s8, 1
    %s17 = sadd.s32 %s16, 1
    %p20 = scmp.eq.s32.totalorder %s8, 1
    %p21 = scmp.ne.s32.totalorder %s16, %s18
    %p22 = scmp.eq.s32.totalorder %s8, 0
    %p23 = por %p21, %p22
    %p24 = scmp.ne.s32.totalorder %s16, %s18
    %p25 = scmp.eq.s32.totalorder %s13, 1
    %p26 = por %p24, %p25
    %p27 = scmp.ne.s32.totalorder %s18, %s19
    %p28 = scmp.eq.s32.totalorder %s13, 0
    %p29 = por %p27, %p28
    %p30 = scmp.ne.s32.totalorder %s18, %s19
    %p31 = scmp.eq.s32.totalorder %s14, 1
    %p32 = por %p30, %p31
    %p34 = scmp.ne.s32.totalorder %s19, %s33
    %p35 = scmp.eq.s32.totalorder %s14, 0
    %p36 = por %p34, %p35
    %s37 = ssub.s32 %s8, %s15
    %p38 = scmp.eq.s32.totalorder %s37, 0
    %s40 = sadd.s32 %s39, 1
    %s41 = scalar_select %p38, %s39, %s40
    %p44 = pneg %p38
    %p45 = scmp.eq.s32.totalorder %s8, 1
    %p46 = por %p44, %p45
    %p47 = scmp.ne.s32.totalorder %s39, %s42
    %p48 = scmp.eq.s32.totalorder %s8, 0
    %p49 = por %p47, %p48
    %p50 = scmp.ne.s32.totalorder %s39, %s42
    %p51 = scmp.eq.s32.totalorder %s13, 1
    %p52 = por %p50, %p51
    %p53 = scmp.ne.s32.totalorder %s42, %s43
    %p54 = scmp.eq.s32.totalorder %s13, 0
    %p55 = por %p53, %p54
    %p56 = scmp.ne.s32.totalorder %s42, %s43
    %p57 = scmp.eq.s32.totalorder %s14, 1
    %p58 = por %p56, %p57
    %p60 = scmp.ne.s32.totalorder %s43, %s59
    %p61 = scmp.eq.s32.totalorder %s14, 0
    %p62 = por %p60, %p61
    %s63 = ssub.s32 %s8, %s15
    %p64 = scmp.eq.s32.totalorder %s63, 0
    %s66 = sadd.s32 %s65, 1
    %s67 = scalar_select %p64, %s65, %s66
    %p70 = pneg %p64
    %p71 = scmp.eq.s32.totalorder %s8, 1
    %p72 = por %p70, %p71
    %p73 = scmp.ne.s32.totalorder %s65, %s68
    %p74 = scmp.eq.s32.totalorder %s8, 0
    %p75 = por %p73, %p74
    %p76 = scmp.ne.s32.totalorder %s65, %s68
    %p77 = scmp.eq.s32.totalorder %s13, 1
    %p78 = por %p76, %p77
    %p79 = scmp.ne.s32.totalorder %s68, %s69
    %p80 = scmp.eq.s32.totalorder %s13, 0
    %p81 = por %p79, %p80
    %p82 = scmp.ne.s32.totalorder %s68, %s69
    %p83 = scmp.eq.s32.totalorder %s14, 1
    %p84 = por %p82, %p83
    %p86 = scmp.ne.s32.totalorder %s69, %s85
    %p87 = scmp.eq.s32.totalorder %s14, 0
    %p88 = por %p86, %p87
    %p89 = scmp.le.s32.totalorder 1, %s8
    %p90 = scmp.lt.s32.totalorder %s8, 3
    %p91 = pnand %p89, %p90
    %p92 = pneg %p91
    // Predicated region
    $region9: #{tpu_custom_call.1} parent=5 // pred_check
      _
    $region10: #{tpu_custom_call.1} parent=5 // pred_check_branch
      %94 = sbr.rel (%p91) target = $region12
    $region11: #{tpu_custom_call.1} parent=5 // pred_region
      %s95 = ssub.s32 %s8, 1
      // Predicated region
      $region13: #{tpu_custom_call.1} parent=11 // pred_check
        %p96 = pneg %p29
      $region14: #{tpu_custom_call.1} parent=11 // pred_check_branch
        %98 = sbr.rel (%p96) target = $region16
      $region15: #{tpu_custom_call.1} parent=11 // pred_region
        _
      $region16: #{tpu_custom_call.1} parent=11 // pred_fallthru
        _
    $region12: #{tpu_custom_call.1} parent=5 // pred_fallthru
      _
    %p99 = scmp.lt.s32.totalorder %s8, 2
    // Predicated region
    $region17: #{tpu_custom_call.1} parent=5 // pred_check
      %p100 = pneg %p99
    $region18: #{tpu_custom_call.1} parent=5 // pred_check_branch
      %102 = sbr.rel (%p100) target = $region20
    $region19: #{tpu_custom_call.1} parent=5 // pred_region
      // Predicated region
      $region21: #{tpu_custom_call.1} parent=19 // pred_check
        %p103 = pneg %p49
      $region22: #{tpu_custom_call.1} parent=19 // pred_check_branch
        %105 = sbr.rel (%p103) target = $region24
      $region23: #{tpu_custom_call.1} parent=19 // pred_region
        %s106 = smul.u32 4, %s8
        %p107 = scmp.lt.s32.totalorder %s106, 7
        %s108 = scalar_select %p107, %s106, 7
        %s109 = smul.addr %s108, 8
        %s110 = scalar_lea.vmem %s1, %s109
        %s111 = smul.u32 4, %s8
      $region24: #{tpu_custom_call.1} parent=19 // pred_fallthru
        _
    $region20: #{tpu_custom_call.1} parent=5 // pred_fallthru
      _
    %p112 = scmp.le.s32.totalorder 1, %s8
    %p113 = scmp.lt.s32.totalorder %s8, 3
    %p114 = pnand %p112, %p113
    %p115 = pneg %p114
    // Predicated region
    $region25: #{tpu_custom_call.1} parent=5 // pred_check
      _
    $region26: #{tpu_custom_call.1} parent=5 // pred_check_branch
      %117 = sbr.rel (%p114) target = $region28
    $region27: #{tpu_custom_call.1} parent=5 // pred_region
      %s118 = ssub.s32 %s8, 1
      %p119 = pneg %p29
      %p120 = pneg %p26
      %s121 = smul.u32 4, %s13
      %p122 = scmp.lt.s32.totalorder %s121, 7
      %s123 = scalar_select %p122, %s121, 7
      %s124 = smul.addr %s123, 8
      %s125 = scalar_lea.vmem %s1, %s124
      %p126 = pneg %p55
      %p127 = pneg %p52
      %p128 = pneg %p81
      %p129 = pneg %p78
      %s130 = smul.u32 4, %s13
      %p131 = scmp.lt.s32.totalorder %s130, 7
      %s132 = scalar_select %p131, %s130, 7
      %s133 = smul.addr %s132, 2
      %s134 = smul.addr %s133, 8
      %s135 = scalar_lea.vmem %s2, %s134
      %s136 = smul.u32 4, %s13
      %p137 = scmp.lt.s32.totalorder %s136, 7
      %s138 = scalar_select %p137, %s136, 7
      %s139 = smul.addr %s138, 8
      %s140 = scalar_lea.vmem %s1, %s139
      %s141 = smul.u32 4, %s13
      %s142 = smul.u32 4, %s13
      %p143 = scmp.lt.s32.totalorder %s142, 7
      %s144 = scalar_select %p143, %s142, 7
      %s145 = smul.addr %s144, 2
      %s146 = smul.addr %s145, 8
      %s147 = scalar_lea.vmem %s2, %s146
      %s148 = smul.u32 4, %s13
      %v149 = vld [vmem:[%s140] sm:$0xff]
      %v150 = vld [vmem:[%s140 + $0x8] sm:$0xff]
      %v151 = vld [vmem:[%s140 + $0x10] sm:$0xff]
      %v152 = vld [vmem:[%s140 + $0x18] sm:$0xff]
      %v153 = vld [vmem:[%s0] sm:$0xff]
      %v154 = vld [vmem:[%s0 + $0x8] sm:$0xff]
      %v155 = vld [vmem:[%s0 + $0x10] sm:$0xff]
      %v156 = vld [vmem:[%s0 + $0x18] sm:$0xff]
      %v157 = vld [vmem:[%s0 + $0x20] sm:$0xff]
      %v158 = vld [vmem:[%s0 + $0x28] sm:$0xff]
      %v159 = vld [vmem:[%s0 + $0x30] sm:$0xff]
      %v160 = vld [vmem:[%s0 + $0x38] sm:$0xff]
      %vm161 = vcmask 261120
      %v163 = vsel %vm161, %v149, 0
      %v166 = vsel %vm161, %v150, 0
      %v169 = vsel %vm161, %v151, 0
      %v172 = vsel %vm161, %v152, 0
      %174 = vmatprep.subr.mxu0 %v154
      %175 = vmatpush1.msra.mxu0 %v153
      %176 = vmatprep.subr.mxu0 %v156
      %177 = vmatpush1.msra.mxu0 %v155
      %178 = vmatprep.subr.mxu0 %v158
      %179 = vmatpush1.msra.mxu0 %v157
      %180 = vmatprep.subr.mxu0 %v160
      %181 = vmatpush1.msra.mxu0 %v159
      %182 = vmatprep.subr.mxu0 0.0
      %183 = vmatpush1.msra.mxu0 0.0
      %184 = vmatprep.subr.mxu0 0.0
      %185 = vmatpush1.msra.mxu0 0.0
      %186 = vmatprep.subr.mxu0 0.0
      %187 = vmatpush1.msra.mxu0 0.0
      %188 = vmatprep.subr.mxu0 0.0
      %189 = vmatpush1.msra.mxu0 0.0
      %190 = vmatprep.subr.mxu0 0.0
      %191 = vmatpush1.msra.mxu0 0.0
      %192 = vmatprep.subr.mxu0 0.0
      %193 = vmatpush1.msra.mxu0 0.0
      %194 = vmatprep.subr.mxu0 0.0
      %195 = vmatpush1.msra.mxu0 0.0
      %196 = vmatprep.subr.mxu0 0.0
      %197 = vmatpush1.msra.mxu0 0.0
      %198 = vmatprep.subr.mxu0 0.0
      %199 = vmatpush1.msra.mxu0 0.0
      %200 = vmatprep.subr.mxu0 0.0
      %201 = vmatpush1.msra.mxu0 0.0
      %202 = vmatprep.subr.mxu0 0.0
      %203 = vmatpush1.msra.mxu0 0.0
      %204 = vmatprep.subr.mxu0 0.0
      %205 = vmatpush1.msra.mxu0 0.0
      %206 = vmatprep.subr.mxu0 0.0
      %207 = vmatpush1.msra.mxu0 0.0
      %208 = vmatprep.subr.mxu0 0.0
      %209 = vmatpush1.msra.mxu0 0.0
      %210 = vmatprep.subr.mxu0 0.0
      %211 = vmatpush1.msra.mxu0 0.0
      %212 = vmatprep.subr.mxu0 0.0
      %213 = vmatpush1.msra.mxu0 0.0
      %214 = vmatprep.subr.mxu0 0.0
      %215 = vmatpush1.msra.mxu0 0.0
      %216 = vmatprep.subr.mxu0 0.0
      %217 = vmatpush1.msra.mxu0 0.0
      %218 = vmatprep.subr.mxu0 0.0
      %219 = vmatpush1.msra.mxu0 0.0
      %220 = vmatprep.subr.mxu0 0.0
      %221 = vmatpush1.msra.mxu0 0.0
      %222 = vmatprep.subr.mxu0 0.0
      %223 = vmatpush1.msra.mxu0 0.0
      %224 = vmatprep.subr.mxu0 0.0
      %225 = vmatpush1.msra.mxu0 0.0
      %226 = vmatprep.subr.mxu0 0.0
      %227 = vmatpush1.msra.mxu0 0.0
      %228 = vmatprep.subr.mxu0 0.0
      %229 = vmatpush1.msra.mxu0 0.0
      %230 = vmatprep.subr.mxu0 0.0
      %231 = vmatpush1.msra.mxu0 0.0
      %232 = vmatprep.subr.mxu0 0.0
      %233 = vmatpush1.msra.mxu0 0.0
      %234 = vmatprep.subr.mxu0 0.0
      %235 = vmatpush1.msra.mxu0 0.0
      %236 = vmatprep.subr.mxu0 0.0
      %237 = vmatpush1.msra.mxu0 0.0
      %238 = vmatprep.mubr.f32.mxu0 0.0
      %239 = vmatmul.mubr.f32.gmra.mrb[0].mxu0 %v163
      %v240 = vpop.f32.mrb[0].mxu0
      %v241 = vadd.f32 0.0, %v240
      %v242 = vpop.f32.mrb[0].mxu0
      %v243 = vadd.f32 0.0, %v242
      %244 = vmatprep.mubr.f32.mxu0 0.0
      %245 = vmatmul.mubr.f32.gmra.mrb[0].mxu0 %v166
      %v246 = vpop.f32.mrb[0].mxu0
      %v247 = vadd.f32 0.0, %v246
      %v248 = vpop.f32.mrb[0].mxu0
      %v249 = vadd.f32 0.0, %v248
      %250 = vmatprep.mubr.f32.mxu0 0.0
      %251 = vmatmul.mubr.f32.gmra.mrb[0].mxu0 %v169
      %v252 = vpop.f32.mrb[0].mxu0
      %v253 = vadd.f32 0.0, %v252
      %v254 = vpop.f32.mrb[0].mxu0
      %v255 = vadd.f32 0.0, %v254
      %256 = vmatprep.mubr.f32.mxu0 0.0
      %257 = vmatmul.mubr.f32.gmra.mrb[0].mxu0 %v172
      %v258 = vpop.f32.mrb[0].mxu0
      %v259 = vadd.f32 0.0, %v258
      %v260 = vpop.f32.mrb[0].mxu0
      %v261 = vadd.f32 0.0, %v260
      %262 = vdwg.mxu0
      %vm263 = vcmask 65536
      %264 = vst.msk [vmem:[%s147] sm:$0x1] %vm263, %v241
      %265 = vst.msk [vmem:[%s147 + $0x10] sm:$0x1] %vm263, %v247
      %266 = vst.msk [vmem:[%s147 + $0x20] sm:$0x1] %vm263, %v253
      %267 = vst.msk [vmem:[%s147 + $0x30] sm:$0x1] %vm263, %v259
      %v272 = vrot.slane %v243, 7
      %v273 = vrot.slane %v249, 7
      %v274 = vrot.slane %v255, 7
      %v275 = vrot.slane %v261, 7
      %v280 = vadd.f32 %v241, %v272
      %v281 = vadd.f32 %v247, %v273
      %v282 = vadd.f32 %v253, %v274
      %v283 = vadd.f32 %v259, %v275
      %vm284 = vcmask 72705
      %285 = vst.msk [vmem:[%s147] sm:$0xfe] %vm284, %v280
      %286 = vst.msk [vmem:[%s147 + $0x10] sm:$0xfe] %vm284, %v281
      %287 = vst.msk [vmem:[%s147 + $0x20] sm:$0xfe] %vm284, %v282
      %288 = vst.msk [vmem:[%s147 + $0x30] sm:$0xfe] %vm284, %v283
      %vm289 = vcmask 72711
      %290 = vst.msk [vmem:[%s147 + $0x1] sm:$0x80] %vm289, %v243
      %291 = vst.msk [vmem:[%s147 + $0x11] sm:$0x80] %vm289, %v249
      %292 = vst.msk [vmem:[%s147 + $0x21] sm:$0x80] %vm289, %v255
      %293 = vst.msk [vmem:[%s147 + $0x31] sm:$0x80] %vm289, %v261
      %s294 = smul.u32 4, %s13
      %p295 = scmp.lt.s32.totalorder %s294, 7
      %s296 = scalar_select %p295, %s294, 7
      %s297 = smul.addr %s296, 2
      %s298 = smul.addr %s297, 8
      %s299 = scalar_lea.vmem %s2, %s298
      // Predicated region
      $region29: #{tpu_custom_call.1} parent=27 // pred_check
        %p300 = pneg %p78
      $region30: #{tpu_custom_call.1} parent=27 // pred_check_branch
        %302 = sbr.rel (%p300) target = $region32
      $region31: #{tpu_custom_call.1} parent=27 // pred_region
        %s303 = smul.u32 4, %s13
      $region32: #{tpu_custom_call.1} parent=27 // pred_fallthru
        _
    $region28: #{tpu_custom_call.1} parent=5 // pred_fallthru
      _
    %p304 = scmp.le.s32.totalorder 2, %s8
    // Predicated region
    $region33: #{tpu_custom_call.1} parent=5 // pred_check
      %p305 = pneg %p304
    $region34: #{tpu_custom_call.1} parent=5 // pred_check_branch
      %307 = sbr.rel (%p305) target = $region36
    $region35: #{tpu_custom_call.1} parent=5 // pred_region
      %s308 = ssub.s32 %s8, 2
      // Predicated region
      $region37: #{tpu_custom_call.1} parent=35 // pred_check
        %p309 = pneg %p84
      $region38: #{tpu_custom_call.1} parent=35 // pred_check_branch
        %311 = sbr.rel (%p309) target = $region40
      $region39: #{tpu_custom_call.1} parent=35 // pred_region
        %s312 = smul.u32 4, %s14
        %p313 = scmp.lt.s32.totalorder %s312, 7
        %s314 = scalar_select %p313, %s312, 7
        %s315 = smul.addr %s314, 2
        %s316 = smul.addr %s315, 8
        %s317 = scalar_lea.vmem %s2, %s316
      $region40: #{tpu_custom_call.1} parent=35 // pred_fallthru
        _
    $region36: #{tpu_custom_call.1} parent=5 // pred_fallthru
      _
  $region6: #{tpu_custom_call.1} parent=0 // loop_footer
    %s12 = sadd.s32 1, %s8
  $region7: #{tpu_custom_call.1} parent=0 // loop_footer_branch
    %7 = sbr.rel target = $region3
  $region8: #{tpu_custom_call.1} parent=0 // loop_exit
    _

</llo_original>
